<compile_context>
chip_gen: v7x
topology: tpu7x:2x2x1
jax: 0.10.0
libtpu: 0.0.40
codegen_flags: <defaults>
</compile_context>

<pallas_src>
import jax
import jax.numpy as jnp
from jax.experimental import pallas as pl
from jax.experimental.pallas import tpu as pltpu


def _round_up(x, m):
    return ((x + m - 1) // m) * m


def _sublane_tile(dtype):
    # Second-minor tile: 8 for 4-byte, 16 for 2-byte, 32 for 1-byte dtypes.
    return max(8, 32 // jnp.dtype(dtype).itemsize)


def _vmem_capacity_bytes():
    try:
        info = pltpu.get_tpu_info()
        cap = getattr(info, "vmem_capacity_bytes", None)
        if cap:
            return int(cap)
    except Exception:
        pass
    return 64 * 1024 * 1024  # conservative default: v7x per-TensorCore VMEM


def _patch_embed_kernel(x_ref, w_ref, b_ref, o_ref):
    # (tm, K) @ (K, E) on the MXU, f32 accumulate, f32 bias add, cast out.
    acc = jnp.dot(x_ref[...], w_ref[...], preferred_element_type=jnp.float32)
    o_ref[...] = (acc + b_ref[...]).astype(o_ref.dtype)


def patch_embed_forward(x, weight, bias, patch_size, *,
                        compute_dtype=jnp.bfloat16,
                        out_dtype=None,
                        force_pallas=False,
                        min_pallas_rows=512):
    """x: (B, C, H, W) NCHW.  weight: (E, C, p, p).  bias: (E,).  -> (B, N, E)."""
    B, C, H, W = x.shape
    E = weight.shape[0]
    p = patch_size
    assert H % p == 0 and W % p == 0
    hp, wp = H // p, W // p
    N = hp * wp
    K = C * p * p
    M = B * N
    out_dtype = x.dtype if out_dtype is None else out_dtype
    cdtype = x.dtype if compute_dtype is None else compute_dtype

    # --- glue: extract non-overlapping patches, flatten like weight.view(E, -1) ---
    # (B, C, hp, p, wp, p) -> (B, hp, wp, C, p, p) -> (B*N, C*p*p)
    # allow_input_fusion below lets XLA fold this producer into the input DMA.
    patches = x.reshape(B, C, hp, p, wp, p)
    patches = jnp.transpose(patches, (0, 2, 4, 1, 3, 5)).reshape(M, K)
    w_flat = weight.reshape(E, K).T                      # (K, E)
    b_row = bias.reshape(1, E).astype(jnp.float32)       # bias add stays f32

    patches = patches.astype(cdtype)
    w_flat = w_flat.astype(cdtype)

    if (not force_pallas) and M < min_pallas_rows:
        # Tiny problem: launch + per-step pipeline overhead dominates.
        out = (jnp.dot(patches, w_flat, preferred_element_type=jnp.float32)
               + b_row).astype(out_dtype)
        return out.reshape(B, N, E)

    in_bytes = jnp.dtype(cdtype).itemsize
    out_bytes = jnp.dtype(out_dtype).itemsize
    sublane = max(_sublane_tile(cdtype), _sublane_tile(out_dtype))

    # --- row tile: target 2048 rows, shrink until the double-buffered working
    # set stays inside a chip-derived VMEM budget. ---
    vmem_budget = _vmem_capacity_bytes() // 4    # 32 MiB on v5e/v6e, 16 MiB on v7x

    def _footprint(t):
        return (2 * t * K * in_bytes          # patches blocks (double buffered)
                + 2 * K * E * in_bytes        # weight blocks (fetched once; tiny)
                + 2 * t * E * out_bytes       # output blocks
                + 2 * E * 4)                  # bias blocks

    tm = min(2048, _round_up(M, sublane))
    while tm > sublane and _footprint(tm) > vmem_budget:
        tm = max(sublane, _round_up(tm // 2, sublane))

    # v7x megacore: prefer >= 2 grid steps so ("parallel",) can split across
    # the two TensorCores (no-op on single-TC v5e/v6e).
    if pl.cdiv(M, tm) == 1 and M > 2 * sublane:
        tm = _round_up(pl.cdiv(M, 2), sublane)

    grid = (pl.cdiv(M, tm),)    # ragged final block is masked by Pallas

    cost = pl.CostEstimate(
        flops=2 * M * K * E,
        transcendentals=0,
        bytes_accessed=(M * K * in_bytes + K * E * in_bytes
                        + E * 4 + M * E * out_bytes))

    out = pl.pallas_call(
        _patch_embed_kernel,
        out_shape=jax.ShapeDtypeStruct((M, E), out_dtype),
        grid_spec=pltpu.PrefetchScalarGridSpec(
            num_scalar_prefetch=0,
            grid=grid,
            in_specs=[
                pl.BlockSpec((tm, K), lambda i: (i, 0)),
                pl.BlockSpec((K, E), lambda i: (0, 0)),   # grid-invariant
                pl.BlockSpec((1, E), lambda i: (0, 0)),   # grid-invariant
            ],
            out_specs=pl.BlockSpec((tm, E), lambda i: (i, 0)),
        ),
        compiler_params=pltpu.CompilerParams(
            dimension_semantics=("parallel",),
            allow_input_fusion=[True, False, False],
            vmem_limit_bytes=int(vmem_budget + (8 << 20)),
        ),
        cost_estimate=cost,
    )(patches, w_flat, b_row)

    return out.reshape(B, N, E)


if __name__ == "__main__":
    patch_size = 8
    in_channels = 4
    embed_dim = 32

    key = jax.random.PRNGKey(0)
    kx, kw, kb, kx2 = jax.random.split(key, 4)

    # Deterministic synthetic parameters (conv weight (E, C, p, p), bias (E,)).
    weight = jax.random.normal(
        kw, (embed_dim, in_channels, patch_size, patch_size), jnp.float32) * 0.02
    bias = jax.random.normal(kb, (embed_dim,), jnp.float32) * 0.02

    def ref_forward(x):
        B, C, H, W = x.shape
        hp, wp = H // patch_size, W // patch_size
        pr = jnp.transpose(
            x.reshape(B, C, hp, patch_size, wp, patch_size),
            (0, 2, 4, 1, 3, 5)).reshape(B, hp * wp, C * patch_size * patch_size)
        return jnp.einsum("bnk,ek->bne", pr, weight.reshape(embed_dim, -1)) + bias

    # Small shape consistent with the module (B=2, C=4, 16x16); force the
    # Pallas path so the kernel is exercised even at this tiny size.
    x = jax.random.normal(kx, (2, in_channels, 16, 16), jnp.float32)
    ref = ref_forward(x)

    # f32 compute path: tight tolerance (validates kernel structure exactly).
    out_f32 = jax.block_until_ready(
        patch_embed_forward(x, weight, bias, patch_size,
                            compute_dtype=jnp.float32, force_pallas=True))
    assert out_f32.shape == (2, 4, embed_dim), out_f32.shape
    assert jnp.allclose(out_f32, ref, atol=1e-4, rtol=1e-4)

    # Default bf16 compute path (f32 accumulation): looser tolerance.
    out_bf16 = jax.block_until_ready(
        patch_embed_forward(x, weight, bias, patch_size, force_pallas=True))
    assert out_bf16.shape == (2, 4, embed_dim), out_bf16.shape
    assert jnp.allclose(out_bf16, ref, atol=2e-2, rtol=5e-2)

    # Larger shape: exercises a multi-step parallel grid and the ragged
    # (non-divisible) final row block, default bf16 compute.
    x2 = jax.random.normal(kx2, (3, in_channels, 128, 120), jnp.float32)
    out2 = jax.block_until_ready(
        patch_embed_forward(x2, weight, bias, patch_size, force_pallas=True))
    assert out2.shape == (3, 240, embed_dim), out2.shape
    assert jnp.allclose(out2, ref_forward(x2), atol=2e-2, rtol=5e-2)

    print("KERNEL_OK")
</pallas_src>

<mosaic_0001>
module attributes {stable_mosaic.version = 11 : i64} {
  func.func @_patch_embed_kernel(%arg0: i32, %arg1: memref<8x256xf32, #tpu.memory_space<vmem>>, %arg2: memref<256x32xf32, #tpu.memory_space<vmem>>, %arg3: memref<1x32xf32, #tpu.memory_space<vmem>>, %arg4: memref<8x32xf32, #tpu.memory_space<vmem>>) attributes {dimension_semantics = [#tpu.dimension_semantics<parallel>], iteration_bounds = array<i64: 1>, scalar_prefetch = 0 : i64, scratch_operands = 0 : i64, tpu.core_type = #tpu.core_type<tc>, window_params = [{transform_indices = @transform_0, window_bounds = array<i64: 8, 256>}, {pipeline_mode = #tpu.pipeline_mode<synchronous>, transform_indices = @transform_1, window_bounds = array<i64: 256, 32>}, {pipeline_mode = #tpu.pipeline_mode<synchronous>, transform_indices = @transform_2, window_bounds = array<i64: 1, 32>}, {transform_indices = @transform_3, window_bounds = array<i64: 8, 32>}]} {
    %c0 = arith.constant 0 : index
    %c0_0 = arith.constant 0 : index
    %0 = vector.load %arg1[%c0, %c0_0] : memref<8x256xf32, #tpu.memory_space<vmem>>, vector<8x256xf32>
    %c0_1 = arith.constant 0 : index
    %c0_2 = arith.constant 0 : index
    %1 = vector.load %arg2[%c0_1, %c0_2] : memref<256x32xf32, #tpu.memory_space<vmem>>, vector<256x32xf32>
    %cst = arith.constant dense<0.000000e+00> : vector<8x32xf32>
    %2 = tpu.matmul %0, %1, %cst {dimension_numbers = #tpu.dot_dimension_numbers<[1], [0], [0], [1], [0, 0, 1, 1], [], []>} : vector<8x256xf32>, vector<256x32xf32>, vector<8x32xf32> -> vector<8x32xf32>
    %c0_3 = arith.constant 0 : index
    %c0_4 = arith.constant 0 : index
    %3 = vector.load %arg3[%c0_3, %c0_4] : memref<1x32xf32, #tpu.memory_space<vmem>>, vector<1x32xf32>
    %4 = vector.broadcast %3 : vector<1x32xf32> to vector<8x32xf32>
    %5 = arith.addf %2, %4 : vector<8x32xf32>
    %c0_5 = arith.constant 0 : index
    %c0_6 = arith.constant 0 : index
    %6 = vector.load %arg4[%c0_5, %c0_6] : memref<8x32xf32, #tpu.memory_space<vmem>>, vector<8x32xf32>
    tpu.vector_store %arg4[%c0_5, %c0_6], %5 {strides = array<i32>} : memref<8x32xf32, #tpu.memory_space<vmem>>, vector<8x32xf32>,
    return
  }
  func.func @transform_0(%arg0: i32) -> (i32, i32) {
    %c0_i32 = arith.constant 0 : i32
    %c0_i32_0 = arith.constant 0 : i32
    return %arg0, %c0_i32 : i32, i32
  }
  func.func @transform_1(%arg0: i32) -> (i32, i32) {
    %c0_i32 = arith.constant 0 : i32
    %c0_i32_0 = arith.constant 0 : i32
    %c0_i32_1 = arith.constant 0 : i32
    return %c0_i32, %c0_i32_0 : i32, i32
  }
  func.func @transform_2(%arg0: i32) -> (i32, i32) {
    %c0_i32 = arith.constant 0 : i32
    %c0_i32_0 = arith.constant 0 : i32
    %c0_i32_1 = arith.constant 0 : i32
    return %c0_i32, %c0_i32_0 : i32, i32
  }
  func.func @transform_3(%arg0: i32) -> (i32, i32) {
    %c0_i32 = arith.constant 0 : i32
    %c0_i32_0 = arith.constant 0 : i32
    return %arg0, %c0_i32 : i32, i32
  }
}

</mosaic_0001>

<llo_original>
// kernel: tpu_custom_call.1
$region0: #{tpu_custom_call.1}
  #allocation0 [shape = 'u32[]', space=smem, size = 0x4, offset = 0x4, fixed_abs, tag = 'smem constant byte address 0x4 - core index']
  #allocation1 [shape = 'u32[144,128]{1,0:T(1,128)}', space=vmem, size = 0x12000, scoped, tag = 'internal scratch']
  %s0 = inlined_call_operand.vmem [shape: f32[8,256], index: 0, kind: input, shape index: {}]
  %s1 = inlined_call_operand.vmem [shape: f32[256,32], index: 1, kind: input, shape index: {}]
  %s2 = inlined_call_operand.vmem [shape: f32[1,32], index: 2, kind: input, shape index: {}]
  %s3 = inlined_call_operand.hbm [shape: f32[8,32], index: 3, kind: output, shape index: {}]
  %s4 = sld [smem:[#allocation0]]
  $region22: #{tpu_custom_call.1} parent=0
    _
  %s6 = ssub.s32 1, %s4
  %s7 = scalar_select 0, %s6, %s4
  $region1: #{tpu_custom_call.1} parent=0
    #allocation2 [shape = 'u8[4096]{0}', space=vmem, size = 0x1000, scoped, tag = 'output window, operand 0, single buffered']
    #allocation3 [shape = 's32[1]{0}', space=sflag, size = 0x4, scoped, tag = 'scoped memory for tpu_custom_call.1']
    %8 = vsyncpa [#allocation3], 0
    // Predicated region
    $region2: #{tpu_custom_call.1} parent=1 // pred_check
      _
    $region3: #{tpu_custom_call.1} parent=1 // pred_check_branch
      %10 = sbr.rel (0) target = $region5
    $region4: #{tpu_custom_call.1} parent=1 // pred_region
      _
    $region5: #{tpu_custom_call.1} parent=1 // pred_fallthru
      _
    // Predicated region
    $region6: #{tpu_custom_call.1} parent=1 // pred_check
      _
    $region7: #{tpu_custom_call.1} parent=1 // pred_check_branch
      %12 = sbr.rel (0) target = $region9
    $region8: #{tpu_custom_call.1} parent=1 // pred_region
      _
    $region9: #{tpu_custom_call.1} parent=1 // pred_fallthru
      _
    // Predicated region
    $region10: #{tpu_custom_call.1} parent=1 // pred_check
      _
    $region11: #{tpu_custom_call.1} parent=1 // pred_check_branch
      %14 = sbr.rel (0) target = $region13
    $region12: #{tpu_custom_call.1} parent=1 // pred_region
      _
    $region13: #{tpu_custom_call.1} parent=1 // pred_fallthru
      _
    %v15 = vld [vmem:[%s0] sm:$0xff]
    %v16 = vld [vmem:[%s0 + $0x8] sm:$0xff]
    %v17 = vld [vmem:[%s1] sm:$0xff]
    %v18 = vld [vmem:[%s1 + $0x8] sm:$0xff]
    %v19 = vld [vmem:[%s1 + $0x10] sm:$0xff]
    %v20 = vld [vmem:[%s1 + $0x18] sm:$0xff]
    %v21 = vld [vmem:[%s1 + $0x20] sm:$0xff]
    %v22 = vld [vmem:[%s1 + $0x28] sm:$0xff]
    %v23 = vld [vmem:[%s1 + $0x30] sm:$0xff]
    %v24 = vld [vmem:[%s1 + $0x38] sm:$0xff]
    %v25 = vld [vmem:[%s1 + $0x40] sm:$0xff]
    %v26 = vld [vmem:[%s1 + $0x48] sm:$0xff]
    %v27 = vld [vmem:[%s1 + $0x50] sm:$0xff]
    %v28 = vld [vmem:[%s1 + $0x58] sm:$0xff]
    %v29 = vld [vmem:[%s1 + $0x60] sm:$0xff]
    %v30 = vld [vmem:[%s1 + $0x68] sm:$0xff]
    %v31 = vld [vmem:[%s1 + $0x70] sm:$0xff]
    %v32 = vld [vmem:[%s1 + $0x78] sm:$0xff]
    %v33 = vld [vmem:[%s1 + $0x80] sm:$0xff]
    %v34 = vld [vmem:[%s1 + $0x88] sm:$0xff]
    %v35 = vld [vmem:[%s1 + $0x90] sm:$0xff]
    %v36 = vld [vmem:[%s1 + $0x98] sm:$0xff]
    %v37 = vld [vmem:[%s1 + $0xa0] sm:$0xff]
    %v38 = vld [vmem:[%s1 + $0xa8] sm:$0xff]
    %v39 = vld [vmem:[%s1 + $0xb0] sm:$0xff]
    %v40 = vld [vmem:[%s1 + $0xb8] sm:$0xff]
    %v41 = vld [vmem:[%s1 + $0xc0] sm:$0xff]
    %v42 = vld [vmem:[%s1 + $0xc8] sm:$0xff]
    %v43 = vld [vmem:[%s1 + $0xd0] sm:$0xff]
    %v44 = vld [vmem:[%s1 + $0xd8] sm:$0xff]
    %v45 = vld [vmem:[%s1 + $0xe0] sm:$0xff]
    %v46 = vld [vmem:[%s1 + $0xe8] sm:$0xff]
    %v47 = vld [vmem:[%s1 + $0xf0] sm:$0xff]
    %v48 = vld [vmem:[%s1 + $0xf8] sm:$0xff]
    %v49 = vld [vmem:[%s2] sm:$0x1]
    %v51 = vlaneseq
    %v52 = vshrl.u32 %v51, 7
    %v53 = vsub.s32 0, %v52
    %v54 = vrot.slane %v49, %v53
    %56 = vmatprep.subr.mxu0 0.0
    %57 = vmatpush1.msra.mxu0 %v17
    %58 = vmatprep.subr.mxu0 0.0
    %59 = vmatpush1.msra.mxu0 %v18
    %60 = vmatprep.subr.mxu0 0.0
    %61 = vmatpush1.msra.mxu0 %v19
    %62 = vmatprep.subr.mxu0 0.0
    %63 = vmatpush1.msra.mxu0 %v20
    %64 = vmatprep.subr.mxu0 0.0
    %65 = vmatpush1.msra.mxu0 %v21
    %66 = vmatprep.subr.mxu0 0.0
    %67 = vmatpush1.msra.mxu0 %v22
    %68 = vmatprep.subr.mxu0 0.0
    %69 = vmatpush1.msra.mxu0 %v23
    %70 = vmatprep.subr.mxu0 0.0
    %71 = vmatpush1.msra.mxu0 %v24
    %72 = vmatprep.subr.mxu0 0.0
    %73 = vmatpush1.msra.mxu0 %v25
    %74 = vmatprep.subr.mxu0 0.0
    %75 = vmatpush1.msra.mxu0 %v26
    %76 = vmatprep.subr.mxu0 0.0
    %77 = vmatpush1.msra.mxu0 %v27
    %78 = vmatprep.subr.mxu0 0.0
    %79 = vmatpush1.msra.mxu0 %v28
    %80 = vmatprep.subr.mxu0 0.0
    %81 = vmatpush1.msra.mxu0 %v29
    %82 = vmatprep.subr.mxu0 0.0
    %83 = vmatpush1.msra.mxu0 %v30
    %84 = vmatprep.subr.mxu0 0.0
    %85 = vmatpush1.msra.mxu0 %v31
    %86 = vmatprep.subr.mxu0 0.0
    %87 = vmatpush1.msra.mxu0 %v32
    %88 = vmatprep.subr.mxu0 0.0
    %89 = vmatpush1.msra.mxu0 %v33
    %90 = vmatprep.subr.mxu0 0.0
    %91 = vmatpush1.msra.mxu0 %v34
    %92 = vmatprep.subr.mxu0 0.0
    %93 = vmatpush1.msra.mxu0 %v35
    %94 = vmatprep.subr.mxu0 0.0
    %95 = vmatpush1.msra.mxu0 %v36
    %96 = vmatprep.subr.mxu0 0.0
    %97 = vmatpush1.msra.mxu0 %v37
    %98 = vmatprep.subr.mxu0 0.0
    %99 = vmatpush1.msra.mxu0 %v38
    %100 = vmatprep.subr.mxu0 0.0
    %101 = vmatpush1.msra.mxu0 %v39
    %102 = vmatprep.subr.mxu0 0.0
    %103 = vmatpush1.msra.mxu0 %v40
    %104 = vmatprep.subr.mxu0 0.0
    %105 = vmatpush1.msra.mxu0 %v41
    %106 = vmatprep.subr.mxu0 0.0
    %107 = vmatpush1.msra.mxu0 %v42
    %108 = vmatprep.subr.mxu0 0.0
    %109 = vmatpush1.msra.mxu0 %v43
    %110 = vmatprep.subr.mxu0 0.0
    %111 = vmatpush1.msra.mxu0 %v44
    %112 = vmatprep.subr.mxu0 0.0
    %113 = vmatpush1.msra.mxu0 %v45
    %114 = vmatprep.subr.mxu0 0.0
    %115 = vmatpush1.msra.mxu0 %v46
    %116 = vmatprep.subr.mxu0 0.0
    %117 = vmatpush1.msra.mxu0 %v47
    %118 = vmatprep.subr.mxu0 0.0
    %119 = vmatpush1.msra.mxu0 %v48
    %120 = vmatprep.mubr.f32.mxu0 %v16
    %121 = vmatmul.mubr.f32.gmra.mrb[0].mxu0 %v15
    %v122 = vpop.f32.mrb[0].mxu0
    %v123 = vadd.f32 %v54, %v122
    %v124 = vpop.f32.mrb[0].mxu0
    %125 = vdwg.mxu0
    %vm126 = vcmask 261120
    %127 = vst.msk [vmem:[#allocation2] sm:$0xff] %vm126, %v123
    // Predicated region
    $region14: #{tpu_custom_call.1} parent=1 // pred_check
      _
    $region15: #{tpu_custom_call.1} parent=1 // pred_check_branch
      %129 = sbr.rel (0) target = $region17
    $region16: #{tpu_custom_call.1} parent=1 // pred_region
      %s131 = ssub.s32 128, 128
      %132 = vsyncadd [#allocation3], %s131
      %s134 = sshll.u32 [#allocation2], 4
      %s135 = int_to_ptr.vmem [resolvable:$true] %s134
      %137 = dma.vmem_to_hbm [thread:$0]  %s135, 128, %s3, [#allocation3]
    $region17: #{tpu_custom_call.1} parent=1 // pred_fallthru
      _
    // Predicated region
    $region18: #{tpu_custom_call.1} parent=1 // pred_check
      _
    $region19: #{tpu_custom_call.1} parent=1 // pred_check_branch
      %139 = sbr.rel (0) target = $region21
    $region20: #{tpu_custom_call.1} parent=1 // pred_region
      %140 = dma.done [#allocation3], 128
    $region21: #{tpu_custom_call.1} parent=1 // pred_fallthru
      _
    %141 = vsyncpa [#allocation3], 1

</llo_original>
